<compile_context>
chip_gen: v6e
topology: v6e:2x2x1
jax: 0.10.0
libtpu: 0.0.40
codegen_flags: <defaults>
</compile_context>

<pallas_src>
import jax
import jax.numpy as jnp
from jax.experimental import pallas as pl
from jax.experimental.pallas import tpu as pltpu

TEMPERATURE = 0.2
MARGIN = 0.3
F_NORMALIZE_EPS = 1e-12   # torch.nn.functional.normalize default eps
COSSIM_EPS = 1e-8         # torch.nn.CosineSimilarity default eps (ref only)
LOG_EPS = 1e-8            # denominator eps in the module


def ntxent_kernel(za_ref, zp_ref, zn_ref, out_ref):
    # za/zp/zn: (B, D) in VMEM; out: (1, 1) f32 in SMEM.
    za = za_ref[...].astype(jnp.float32)
    zp = zp_ref[...].astype(jnp.float32)
    zn = zn_ref[...].astype(jnp.float32)
    b = za.shape[0]

    # F.normalize(x, dim=-1) == x / max(||x||, eps) == x * rsqrt(max(sumsq, eps^2))
    def l2_normalize(x):
        sumsq = jnp.sum(x * x, axis=-1, keepdims=True)
        return x * jax.lax.rsqrt(
            jnp.maximum(sumsq, F_NORMALIZE_EPS * F_NORMALIZE_EPS))

    a = l2_normalize(za)
    p = l2_normalize(zp)
    n = l2_normalize(zn)

    # Rows are unit-norm (or exactly zero) after normalization, so
    # CosineSimilarity(dim=-1) reduces to a plain dot product.
    inv_t = 1.0 / TEMPERATURE
    pos_sim = jnp.sum(a * p, axis=-1, keepdims=True) * inv_t        # (B, 1)
    neg_sim = jnp.sum(a * n, axis=-1, keepdims=True) * inv_t        # (B, 1)
    neg_sim = jnp.minimum(neg_sim, 1.0 - MARGIN)                    # clamp(max=0.7)

    # -log(exp(pos) / (exp(pos) + exp(neg) + eps))
    #   == log(exp(pos) + exp(neg) + eps) - pos
    denominator = jnp.exp(pos_sim) + jnp.exp(neg_sim)
    loss = jnp.log(denominator + LOG_EPS) - pos_sim                 # (B, 1)

    # Mean over the batch, emitted as a scalar to SMEM.
    out_ref[0, 0] = jnp.sum(loss) * (1.0 / b)


@jax.jit
def ntxent_loss(z_a, z_p, z_n):
    assert z_a.shape == z_p.shape == z_n.shape and z_a.ndim == 2
    out = pl.pallas_call(
        ntxent_kernel,
        out_shape=jax.ShapeDtypeStruct((1, 1), jnp.float32),
        in_specs=[
            pl.BlockSpec(memory_space=pltpu.MemorySpace.VMEM),
            pl.BlockSpec(memory_space=pltpu.MemorySpace.VMEM),
            pl.BlockSpec(memory_space=pltpu.MemorySpace.VMEM),
        ],
        out_specs=pl.BlockSpec(memory_space=pltpu.MemorySpace.SMEM),
    )(z_a, z_p, z_n)
    return out[0, 0]


if __name__ == "__main__":
    # NTXentLoss has no learnable parameters (temperature is a fixed hyperparam).
    key = jax.random.PRNGKey(0)
    k_a, k_p, k_n = jax.random.split(key, 3)
    B, D = 8, 32
    z_a = jax.random.normal(k_a, (B, D), dtype=jnp.float32)
    z_p = jax.random.normal(k_p, (B, D), dtype=jnp.float32)
    z_n = jax.random.normal(k_n, (B, D), dtype=jnp.float32)

    loss = ntxent_loss(z_a, z_p, z_n)
    jax.block_until_ready(loss)

    # Pure-JAX reference matching the PyTorch module's exact op composition.
    def ref(za, zp, zn):
        def nrm(x):
            return x / jnp.maximum(
                jnp.linalg.norm(x, axis=-1, keepdims=True), F_NORMALIZE_EPS)
        a, p, n = nrm(za), nrm(zp), nrm(zn)

        def cs(u, v):
            return jnp.sum(u * v, -1) / (
                jnp.maximum(jnp.linalg.norm(u, axis=-1), COSSIM_EPS)
                * jnp.maximum(jnp.linalg.norm(v, axis=-1), COSSIM_EPS))

        pos = cs(a, p) / TEMPERATURE
        neg = jnp.minimum(cs(a, n) / TEMPERATURE, 1.0 - MARGIN)
        num = jnp.exp(pos)
        den = num + jnp.exp(neg)
        return jnp.mean(-jnp.log(num / (den + LOG_EPS)))

    expected = ref(z_a, z_p, z_n)
    assert jnp.allclose(loss, expected, atol=1e-5, rtol=1e-4), (loss, expected)
    print("KERNEL_OK")
</pallas_src>

<mosaic_0001>
module attributes {stable_mosaic.version = 11 : i64} {
  func.func @ntxent_kernel(%arg0: memref<8x32xf32, #tpu.memory_space<vmem>>, %arg1: memref<8x32xf32, #tpu.memory_space<vmem>>, %arg2: memref<8x32xf32, #tpu.memory_space<vmem>>, %arg3: memref<1x1xf32, #tpu.memory_space<smem>>) attributes {dimension_semantics = [], scalar_prefetch = 0 : i64, scratch_operands = 0 : i64, tpu.core_type = #tpu.core_type<tc>} {
    %c0 = arith.constant 0 : index
    %c0_0 = arith.constant 0 : index
    %0 = vector.load %arg0[%c0, %c0_0] : memref<8x32xf32, #tpu.memory_space<vmem>>, vector<8x32xf32>
    %c0_1 = arith.constant 0 : index
    %c0_2 = arith.constant 0 : index
    %1 = vector.load %arg1[%c0_1, %c0_2] : memref<8x32xf32, #tpu.memory_space<vmem>>, vector<8x32xf32>
    %c0_3 = arith.constant 0 : index
    %c0_4 = arith.constant 0 : index
    %2 = vector.load %arg2[%c0_3, %c0_4] : memref<8x32xf32, #tpu.memory_space<vmem>>, vector<8x32xf32>
    %3 = arith.mulf %0, %0 : vector<8x32xf32>
    %cst = arith.constant dense<0.000000e+00> : vector<8xf32>
    %4 = vector.multi_reduction <add>, %3, %cst [1] : vector<8x32xf32> to vector<8xf32>
    %5 = vector.shape_cast %4 : vector<8xf32> to vector<8x1xf32>
    %cst_5 = arith.constant 1.000000e-24 : f32
    %6 = vector.broadcast %cst_5 : f32 to vector<8x1xf32>
    %7 = arith.maximumf %5, %6 : vector<8x1xf32>
    %8 = math.rsqrt %7 : vector<8x1xf32>
    %9 = vector.broadcast %8 : vector<8x1xf32> to vector<8x32xf32>
    %10 = arith.mulf %0, %9 : vector<8x32xf32>
    %11 = arith.mulf %1, %1 : vector<8x32xf32>
    %cst_6 = arith.constant dense<0.000000e+00> : vector<8xf32>
    %12 = vector.multi_reduction <add>, %11, %cst_6 [1] : vector<8x32xf32> to vector<8xf32>
    %13 = vector.shape_cast %12 : vector<8xf32> to vector<8x1xf32>
    %cst_7 = arith.constant 1.000000e-24 : f32
    %14 = vector.broadcast %cst_7 : f32 to vector<8x1xf32>
    %15 = arith.maximumf %13, %14 : vector<8x1xf32>
    %16 = math.rsqrt %15 : vector<8x1xf32>
    %17 = vector.broadcast %16 : vector<8x1xf32> to vector<8x32xf32>
    %18 = arith.mulf %1, %17 : vector<8x32xf32>
    %19 = arith.mulf %2, %2 : vector<8x32xf32>
    %cst_8 = arith.constant dense<0.000000e+00> : vector<8xf32>
    %20 = vector.multi_reduction <add>, %19, %cst_8 [1] : vector<8x32xf32> to vector<8xf32>
    %21 = vector.shape_cast %20 : vector<8xf32> to vector<8x1xf32>
    %cst_9 = arith.constant 1.000000e-24 : f32
    %22 = vector.broadcast %cst_9 : f32 to vector<8x1xf32>
    %23 = arith.maximumf %21, %22 : vector<8x1xf32>
    %24 = math.rsqrt %23 : vector<8x1xf32>
    %25 = vector.broadcast %24 : vector<8x1xf32> to vector<8x32xf32>
    %26 = arith.mulf %2, %25 : vector<8x32xf32>
    %27 = arith.mulf %10, %18 : vector<8x32xf32>
    %cst_10 = arith.constant dense<0.000000e+00> : vector<8xf32>
    %28 = vector.multi_reduction <add>, %27, %cst_10 [1] : vector<8x32xf32> to vector<8xf32>
    %29 = vector.shape_cast %28 : vector<8xf32> to vector<8x1xf32>
    %cst_11 = arith.constant 5.000000e+00 : f32
    %30 = vector.broadcast %cst_11 : f32 to vector<8x1xf32>
    %31 = arith.mulf %29, %30 : vector<8x1xf32>
    %32 = arith.mulf %10, %26 : vector<8x32xf32>
    %cst_12 = arith.constant dense<0.000000e+00> : vector<8xf32>
    %33 = vector.multi_reduction <add>, %32, %cst_12 [1] : vector<8x32xf32> to vector<8xf32>
    %34 = vector.shape_cast %33 : vector<8xf32> to vector<8x1xf32>
    %cst_13 = arith.constant 5.000000e+00 : f32
    %35 = vector.broadcast %cst_13 : f32 to vector<8x1xf32>
    %36 = arith.mulf %34, %35 : vector<8x1xf32>
    %cst_14 = arith.constant 0.699999988 : f32
    %37 = vector.broadcast %cst_14 : f32 to vector<8x1xf32>
    %38 = arith.minimumf %36, %37 : vector<8x1xf32>
    %39 = math.exp %31 : vector<8x1xf32>
    %40 = math.exp %38 : vector<8x1xf32>
    %41 = arith.addf %39, %40 : vector<8x1xf32>
    %cst_15 = arith.constant 9.99999993E-9 : f32
    %42 = vector.broadcast %cst_15 : f32 to vector<8x1xf32>
    %43 = arith.addf %41, %42 : vector<8x1xf32>
    %44 = math.log %43 : vector<8x1xf32>
    %45 = arith.subf %44, %31 : vector<8x1xf32>
    %46 = vector.shape_cast %45 : vector<8x1xf32> to vector<1x8x1xf32>
    %cst_16 = arith.constant dense<0.000000e+00> : vector<1xf32>
    %47 = vector.multi_reduction <add>, %46, %cst_16 [1, 2] : vector<1x8x1xf32> to vector<1xf32>
    %48 = vector.shape_cast %47 : vector<1xf32> to vector<1x1x1xf32>
    %49 = vector.extract %48[0, 0, 0] : f32 from vector<1x1x1xf32>
    %cst_17 = arith.constant 1.250000e-01 : f32
    %50 = arith.mulf %49, %cst_17 : f32
    %c0_18 = arith.constant 0 : index
    %c0_19 = arith.constant 0 : index
    %51 = memref.load %arg3[%c0_18, %c0_19] : memref<1x1xf32, #tpu.memory_space<smem>>
    memref.store %50, %arg3[%c0_18, %c0_19] : memref<1x1xf32, #tpu.memory_space<smem>>
    return
  }
}

</mosaic_0001>

<llo_original>
// kernel: ntxent_loss.1
$region0: #{ntxent_loss.1}
  #allocation0 [shape = 'u32[]', space=smem, size = 0x4, offset = 0x4, fixed_abs, tag = 'smem constant byte address 0x4 - core index']
  #allocation1 [shape = 'u32[144,128]{1,0:T(1,128)}', space=vmem, size = 0x12000, scoped, tag = 'internal scratch']
  %s0 = inlined_call_operand.hbm [shape: f32[8,32], index: 0, kind: input, shape index: {}]
  %s1 = inlined_call_operand.hbm [shape: f32[8,32], index: 1, kind: input, shape index: {}]
  %s2 = inlined_call_operand.hbm [shape: f32[8,32], index: 2, kind: input, shape index: {}]
  %s3 = inlined_call_operand.hbm [shape: f32[1,1], index: 3, kind: output, shape index: {}]
  %s4 = sld [smem:[#allocation0]]
  $region34: #{ntxent_loss.1} parent=0
    _
  %s6 = ssub.s32 1, %s4
  %s7 = scalar_select 0, %s6, %s4
  $region1: #{ntxent_loss.1} parent=0
    #allocation2 [shape = 'u8[4096]{0}', space=vmem, size = 0x1000, scoped, tag = 'input window, operand 0, single buffered']
    #allocation3 [shape = 's32[1]{0}', space=sflag, size = 0x4, scoped, tag = 'scoped memory for ntxent_loss.1']
    #allocation4 [shape = 's32[1]{0}', space=sflag, size = 0x4, scoped, tag = 'scoped memory for ntxent_loss.1']
    #allocation5 [shape = 'u8[4096]{0}', space=vmem, size = 0x1000, scoped, tag = 'input window, operand 1, single buffered']
    #allocation6 [shape = 's32[1]{0}', space=sflag, size = 0x4, scoped, tag = 'scoped memory for ntxent_loss.1']
    #allocation7 [shape = 'u8[4096]{0}', space=vmem, size = 0x1000, scoped, tag = 'input window, operand 2, single buffered']
    #allocation8 [shape = 'u8[512]{0}', space=smem, size = 0x200, scoped, tag = 'output window, operand 0, single buffered']
    %8 = vsyncpa [#allocation3], 0
    %9 = vsyncpa [#allocation6], 0
    %10 = vsyncpa [#allocation4], 0
    // Predicated region
    $region2: #{ntxent_loss.1} parent=1 // pred_check
      _
    $region3: #{ntxent_loss.1} parent=1 // pred_check_branch
      %12 = sbr.rel (0) target = $region5
    $region4: #{ntxent_loss.1} parent=1 // pred_region
      %s14 = ssub.s32 128, 128
      %15 = vsyncadd [#allocation3], %s14
      %s17 = sshll.u32 [#allocation2], 4
      %s18 = int_to_ptr.vmem [resolvable:$true] %s17
      %20 = dma.hbm_to_vmem [thread:$0]  %s0, 128, %s18, [#allocation3]
    $region5: #{ntxent_loss.1} parent=1 // pred_fallthru
      _
    // Predicated region
    $region6: #{ntxent_loss.1} parent=1 // pred_check
      _
    $region7: #{ntxent_loss.1} parent=1 // pred_check_branch
      %22 = sbr.rel (0) target = $region9
    $region8: #{ntxent_loss.1} parent=1 // pred_region
      %s24 = ssub.s32 128, 128
      %25 = vsyncadd [#allocation6], %s24
      %s27 = sshll.u32 [#allocation5], 4
      %s28 = int_to_ptr.vmem [resolvable:$true] %s27
      %30 = dma.hbm_to_vmem [thread:$0]  %s1, 128, %s28, [#allocation6]
    $region9: #{ntxent_loss.1} parent=1 // pred_fallthru
      _
    // Predicated region
    $region10: #{ntxent_loss.1} parent=1 // pred_check
      _
    $region11: #{ntxent_loss.1} parent=1 // pred_check_branch
      %32 = sbr.rel (0) target = $region13
    $region12: #{ntxent_loss.1} parent=1 // pred_region
      %s34 = ssub.s32 128, 128
      %35 = vsyncadd [#allocation6], %s34
      %s37 = sshll.u32 [#allocation7], 4
      %s38 = int_to_ptr.vmem [resolvable:$true] %s37
      %40 = dma.hbm_to_vmem [thread:$0]  %s2, 128, %s38, [#allocation6]
    $region13: #{ntxent_loss.1} parent=1 // pred_fallthru
      _
    // Predicated region
    $region14: #{ntxent_loss.1} parent=1 // pred_check
      _
    $region15: #{ntxent_loss.1} parent=1 // pred_check_branch
      %42 = sbr.rel (0) target = $region17
    $region16: #{ntxent_loss.1} parent=1 // pred_region
      %43 = dma.done [#allocation3], 128
    $region17: #{ntxent_loss.1} parent=1 // pred_fallthru
      _
    // Predicated region
    $region18: #{ntxent_loss.1} parent=1 // pred_check
      _
    $region19: #{ntxent_loss.1} parent=1 // pred_check_branch
      %45 = sbr.rel (0) target = $region21
    $region20: #{ntxent_loss.1} parent=1 // pred_region
      %46 = dma.done [#allocation6], 128
    $region21: #{ntxent_loss.1} parent=1 // pred_fallthru
      _
    // Predicated region
    $region22: #{ntxent_loss.1} parent=1 // pred_check
      _
    $region23: #{ntxent_loss.1} parent=1 // pred_check_branch
      %48 = sbr.rel (0) target = $region25
    $region24: #{ntxent_loss.1} parent=1 // pred_region
      %49 = dma.done [#allocation6], 128
    $region25: #{ntxent_loss.1} parent=1 // pred_fallthru
      _
    %v50 = vld [vmem:[#allocation2] sm:$0xff]
    %v51 = vld [vmem:[#allocation5] sm:$0xff]
    %v52 = vld [vmem:[#allocation7] sm:$0xff]
    %v53 = vmul.f32 %v50, %v50
    %vm54 = vcmask 261120
    %v55 = vsel %vm54, %v53, 0.0
    %56 = vadd.xlane.f32.xlu0 %v55
    %v57 = vpop.xlane.xlu0 %56
    %v58 = vmax.f32 %v57, 1e-24
    %v59 = vrsqrt.pop %v58
    %v60 = vmul.f32 %v50, %v59
    %v61 = vmul.f32 %v51, %v51
    %v62 = vsel %vm54, %v61, 0.0
    %63 = vadd.xlane.f32.xlu0 %v62
    %v64 = vpop.xlane.xlu0 %63
    %v65 = vmax.f32 %v64, 1e-24
    %v66 = vrsqrt.pop %v65
    %v67 = vmul.f32 %v51, %v66
    %v68 = vmul.f32 %v52, %v52
    %v69 = vsel %vm54, %v68, 0.0
    %70 = vadd.xlane.f32.xlu0 %v69
    %v71 = vpop.xlane.xlu0 %70
    %v72 = vmax.f32 %v71, 1e-24
    %v73 = vrsqrt.pop %v72
    %v74 = vmul.f32 %v52, %v73
    %v75 = vmul.f32 %v60, %v67
    %v76 = vsel %vm54, %v75, 0.0
    %77 = vadd.xlane.f32.xlu0 %v76
    %v78 = vpop.xlane.xlu0 %77
    %v79 = vmul.f32 %v78, 5.0
    %v80 = vmul.f32 %v60, %v74
    %v81 = vsel %vm54, %v80, 0.0
    %82 = vadd.xlane.f32.xlu0 %v81
    %v83 = vpop.xlane.xlu0 %82
    %v84 = vmul.f32 %v83, 5.0
    %v85 = vmin.f32 %v84, 0.7
    %v86 = vmul.f32 %v79, 1.442695
    %v87 = vpow.pop %v86
    %v88 = vmul.f32 %v85, 1.442695
    %v89 = vpow.pop %v88
    %v90 = vadd.f32 %v87, %v89
    %v91 = vadd.f32 %v90, 1e-08
    %v92 = vlog2.pop %v91
    %v93 = vmul.f32 %v92, 0.6931472
    %v94 = vsub.f32 %v93, %v79
    %vm95 = vcmask 7168
    %v96 = vsel %vm95, %v94, 0.0
    %97 = vadd.xlane.f32.xlu0 %v96
    %v98 = vpop.xlane.xlu0 %97
    %v99 = vrot.slane %v98, 4
    %v100 = vadd.f32 %v98, %v99
    %v101 = vrot.slane %v100, 2
    %v102 = vadd.f32 %v100, %v101
    %v103 = vrot.slane %v102, 1
    %v104 = vadd.f32 %v102, %v103
    %s105 = vtos %v104
    %s106 = smul.f32 %s105, 0.125
    %s107 = scalar_lea.smem [#allocation8], 0
    %108 = sst [smem:[%s107]] %s106
    // Predicated region
    $region26: #{ntxent_loss.1} parent=1 // pred_check
      _
    $region27: #{ntxent_loss.1} parent=1 // pred_check_branch
      %110 = sbr.rel (0) target = $region29
    $region28: #{ntxent_loss.1} parent=1 // pred_region
      %s112 = ssub.s32 16, 16
      %113 = vsyncadd [#allocation4], %s112
      %116 = dma.smem_to_hbm [#allocation8], 16, %s3, [#allocation4]
    $region29: #{ntxent_loss.1} parent=1 // pred_fallthru
      _
    // Predicated region
    $region30: #{ntxent_loss.1} parent=1 // pred_check
      _
    $region31: #{ntxent_loss.1} parent=1 // pred_check_branch
      %118 = sbr.rel (0) target = $region33
    $region32: #{ntxent_loss.1} parent=1 // pred_region
      %119 = dma.done [#allocation4], 16
    $region33: #{ntxent_loss.1} parent=1 // pred_fallthru
      _
    %120 = sfence
    %121 = vsyncpa [#allocation3], 1
    %122 = vsyncpa [#allocation6], 1
    %123 = vsyncpa [#allocation4], 1

</llo_original>
